<compile_context>
chip_gen: v7x
topology: tpu7x:2x2x1
jax: 0.10.0
libtpu: 0.0.40
codegen_flags: <defaults>
</compile_context>

<pallas_src>
import jax
import jax.numpy as jnp
from jax.experimental import pallas as pl
from jax.experimental.pallas import tpu as pltpu


def _support_kernel(x_ref, w_ref, sup_ref):
    # support_tile = x_tile @ W, f32 accumulation on the MXU, stored bf16.
    sup_ref[...] = jnp.dot(
        x_ref[...], w_ref[...], preferred_element_type=jnp.float32
    ).astype(sup_ref.dtype)


def _adj_matmul_kernel(adj_ref, sup_ref, out_ref):
    # out_tile = adj_tile @ support (bf16 inputs, f32 accumulation).
    out_ref[...] = jnp.dot(
        adj_ref[...], sup_ref[...], preferred_element_type=jnp.float32
    ).astype(out_ref.dtype)


def gcn_layer(x, adj, weight, *, tile_m=256):
    """Pallas implementation of GCNLayer.forward (bias=False, batch_norm=False)."""
    N, F = x.shape
    Fw, H = weight.shape
    assert Fw == F
    assert adj.shape == (N, N)
    out_dtype = x.dtype

    tile_m = min(tile_m, N)
    assert N % tile_m == 0, "N must be divisible by tile_m"
    grid = (N // tile_m,)

    # ---------- 1) support = x @ W (small, tiled over rows, parallel axis) ----------
    support = pl.pallas_call(
        _support_kernel,
        out_shape=jax.ShapeDtypeStruct((N, H), jnp.bfloat16),
        grid_spec=pltpu.PrefetchScalarGridSpec(
            num_scalar_prefetch=0,
            grid=grid,
            in_specs=[
                pl.BlockSpec((tile_m, F), lambda i: (i, 0)),  # x row tile
                pl.BlockSpec((F, H), lambda i: (0, 0)),       # W (resident)
            ],
            out_specs=pl.BlockSpec((tile_m, H), lambda i: (i, 0)),
        ),
        compiler_params=pltpu.CompilerParams(
            dimension_semantics=("parallel",),
        ),
        cost_estimate=pl.CostEstimate(
            flops=2 * N * F * H,
            transcendentals=0,
            bytes_accessed=(
                N * F * jnp.dtype(x.dtype).itemsize
                + F * H * jnp.dtype(weight.dtype).itemsize
                + N * H * 2
            ),
        ),
    )(x, weight)

    # ---------- 2) out = adj @ support (HBM-bandwidth bound on the adj stream) ----------
    adj_bf16 = adj.astype(jnp.bfloat16)

    # VMEM budget: double-buffered bf16 adj tile + resident bf16 support +
    # double-buffered f32 output tile + slack.  32 MiB floor (v6e/v7x default),
    # raised only as needed, capped below physical limits.  For very large N on
    # v7x (64 MiB VMEM) a K grid axis over adj should be added instead of
    # raising the limit further.
    vmem_needed = (
        2 * tile_m * N * 2
        + 2 * N * H * 2
        + 2 * tile_m * H * jnp.dtype(out_dtype).itemsize
        + (2 << 20)
    )
    vmem_limit = int(min(max(vmem_needed, 32 * 1024 * 1024), 100 * 1024 * 1024))

    out = pl.pallas_call(
        _adj_matmul_kernel,
        out_shape=jax.ShapeDtypeStruct((N, H), out_dtype),
        grid_spec=pltpu.PrefetchScalarGridSpec(
            num_scalar_prefetch=0,
            grid=grid,
            in_specs=[
                pl.BlockSpec((tile_m, N), lambda i: (i, 0)),  # adj row tile (bf16 stream)
                pl.BlockSpec((N, H), lambda i: (0, 0)),       # support (resident, bf16)
            ],
            out_specs=pl.BlockSpec((tile_m, H), lambda i: (i, 0)),
        ),
        compiler_params=pltpu.CompilerParams(
            # Row tiles are fully independent -> shard across TensorCores on v7x.
            dimension_semantics=("parallel",),
            vmem_limit_bytes=vmem_limit,
        ),
        cost_estimate=pl.CostEstimate(
            flops=2 * N * N * H,
            transcendentals=0,
            bytes_accessed=N * N * 2 + N * H * 2 + N * H * jnp.dtype(out_dtype).itemsize,
        ),
    )(adj_bf16, support)

    return out


def xavier_uniform(key, shape, dtype=jnp.float32):
    fan_in, fan_out = shape
    limit = (6.0 / (fan_in + fan_out)) ** 0.5
    return jax.random.uniform(key, shape, dtype, minval=-limit, maxval=limit)


if __name__ == "__main__":
    # Small shapes consistent with the module: N nodes, in_feats, n_hidden.
    N, in_feats, n_hidden = 512, 32, 32
    key = jax.random.PRNGKey(0)
    kx, ka, kw = jax.random.split(key, 3)

    x = jax.random.normal(kx, (N, in_feats), dtype=jnp.float32)
    # Symmetric row-normalized adjacency-like matrix (dense, synthetic).
    a = jax.random.uniform(ka, (N, N), dtype=jnp.float32)
    adj = (a + a.T) * 0.5
    adj = adj / jnp.sum(adj, axis=-1, keepdims=True)

    # Deterministic xavier_uniform init of the (in_feats, n_hidden) weight.
    weight = xavier_uniform(kw, (in_feats, n_hidden))

    out = jax.block_until_ready(gcn_layer(x, adj, weight))

    # Reference check against plain JAX (same semantics as the PyTorch forward).
    ref = adj @ (x @ weight)
    assert out.shape == (N, n_hidden)
    assert out.dtype == x.dtype
    # adj/support are streamed in bf16 (f32 accumulation) -> relaxed tolerance
    # against the exact f32 reference.
    max_err = float(jnp.max(jnp.abs(out - ref)))
    assert jnp.allclose(out, ref, atol=1e-2, rtol=2e-2), max_err

    print("KERNEL_OK")
</pallas_src>

<mosaic_0001>
module attributes {stable_mosaic.version = 11 : i64} {
  func.func @_support_kernel(%arg0: i32, %arg1: memref<256x32xf32, #tpu.memory_space<vmem>>, %arg2: memref<32x32xf32, #tpu.memory_space<vmem>>, %arg3: memref<256x32xbf16, #tpu.memory_space<vmem>>) attributes {dimension_semantics = [#tpu.dimension_semantics<parallel>], iteration_bounds = array<i64: 2>, scalar_prefetch = 0 : i64, scratch_operands = 0 : i64, tpu.core_type = #tpu.core_type<tc>, window_params = [{transform_indices = @transform_0, window_bounds = array<i64: 256, 32>}, {pipeline_mode = #tpu.pipeline_mode<synchronous>, transform_indices = @transform_1, window_bounds = array<i64: 32, 32>}, {transform_indices = @transform_2, window_bounds = array<i64: 256, 32>}]} {
    %c0 = arith.constant 0 : index
    %c0_0 = arith.constant 0 : index
    %0 = vector.load %arg1[%c0, %c0_0] : memref<256x32xf32, #tpu.memory_space<vmem>>, vector<256x32xf32>
    %c0_1 = arith.constant 0 : index
    %c0_2 = arith.constant 0 : index
    %1 = vector.load %arg2[%c0_1, %c0_2] : memref<32x32xf32, #tpu.memory_space<vmem>>, vector<32x32xf32>
    %cst = arith.constant dense<0.000000e+00> : vector<256x32xf32>
    %2 = tpu.matmul %0, %1, %cst {dimension_numbers = #tpu.dot_dimension_numbers<[1], [0], [0], [1], [0, 0, 1, 1], [], []>} : vector<256x32xf32>, vector<32x32xf32>, vector<256x32xf32> -> vector<256x32xf32>
    %3 = arith.truncf %2 : vector<256x32xf32> to vector<256x32xbf16>
    %c0_3 = arith.constant 0 : index
    %c0_4 = arith.constant 0 : index
    %4 = vector.load %arg3[%c0_3, %c0_4] : memref<256x32xbf16, #tpu.memory_space<vmem>>, vector<256x32xbf16>
    tpu.vector_store %arg3[%c0_3, %c0_4], %3 {strides = array<i32>} : memref<256x32xbf16, #tpu.memory_space<vmem>>, vector<256x32xbf16>,
    return
  }
  func.func @transform_0(%arg0: i32) -> (i32, i32) {
    %c0_i32 = arith.constant 0 : i32
    %c0_i32_0 = arith.constant 0 : i32
    return %arg0, %c0_i32 : i32, i32
  }
  func.func @transform_1(%arg0: i32) -> (i32, i32) {
    %c0_i32 = arith.constant 0 : i32
    %c0_i32_0 = arith.constant 0 : i32
    %c0_i32_1 = arith.constant 0 : i32
    return %c0_i32, %c0_i32_0 : i32, i32
  }
  func.func @transform_2(%arg0: i32) -> (i32, i32) {
    %c0_i32 = arith.constant 0 : i32
    %c0_i32_0 = arith.constant 0 : i32
    return %arg0, %c0_i32 : i32, i32
  }
}

</mosaic_0001>

<llo_original>
// kernel: tpu_custom_call.1
$region0: #{tpu_custom_call.1}
  #allocation0 [shape = 'u32[]', space=smem, size = 0x4, offset = 0x4, fixed_abs, tag = 'smem constant byte address 0x4 - core index']
  #allocation1 [shape = 'u32[144,128]{1,0:T(1,128)}', space=vmem, size = 0x12000, scoped, tag = 'internal scratch']
  %s0 = inlined_call_operand.vmem [shape: f32[512,32], index: 0, kind: input, shape index: {}]
  %s1 = inlined_call_operand.vmem [shape: f32[32,32], index: 1, kind: input, shape index: {}]
  %s2 = inlined_call_operand.vmem [shape: bf16[512,32], index: 2, kind: output, shape index: {}]
  %s3 = sld [smem:[#allocation0]]
  $region41: #{tpu_custom_call.1} parent=0
    _
  %s5 = ssub.s32 1, %s3
  %s6 = scalar_select 0, %s5, %s3
  loop: start=0, step=1, limit=4
  $region2: #{tpu_custom_call.1} parent=0 // loop_pre_header
    _
  $region3: #{tpu_custom_call.1} parent=0 // loop_header
    %s8 = sphi 0, %s12
    %p9 = scmp.ge.s32.totalorder %s8, 4
    %s18 = sphi 0, %s20
    %s21 = sphi 0, %s18
    %s22 = sphi 0, %s21
    %s38 = sphi 0, %s22
    %s42 = sphi 0, %s42
    %s44 = sphi 0, %s42
    %s45 = sphi 0, %s44
    %s59 = sphi 0, %s45
    %s65 = sphi 0, %s67
    %s68 = sphi 0, %s65
    %s69 = sphi 0, %s68
    %s85 = sphi 0, %s69
  $region4: #{tpu_custom_call.1} parent=0 // loop_header_branch
    %11 = sbr.rel (%p9) target = $region8
  $region5: #{tpu_custom_call.1} parent=0 // loop_body
    %s13 = ssub.s32 %s8, 1
    %s14 = ssub.s32 %s8, 2
    %s15 = sadd.s32 %s8, 1
    %s16 = ssub.s32 %s8, %s15
    %p17 = scmp.eq.s32.totalorder %s16, 0
    %s19 = sadd.s32 %s18, 1
    %s20 = scalar_select %p17, %s18, %s19
    %p23 = pneg %p17
    %p24 = scmp.eq.s32.totalorder %s8, 1
    %p25 = por %p23, %p24
    %p26 = scmp.ne.s32.totalorder %s18, %s21
    %p27 = scmp.eq.s32.totalorder %s8, 0
    %p28 = por %p26, %p27
    %p29 = scmp.ne.s32.totalorder %s18, %s21
    %p30 = scmp.eq.s32.totalorder %s13, 1
    %p31 = por %p29, %p30
    %p32 = scmp.ne.s32.totalorder %s21, %s22
    %p33 = scmp.eq.s32.totalorder %s13, 0
    %p34 = por %p32, %p33
    %p35 = scmp.ne.s32.totalorder %s21, %s22
    %p36 = scmp.eq.s32.totalorder %s14, 1
    %p37 = por %p35, %p36
    %p39 = scmp.ne.s32.totalorder %s22, %s38
    %p40 = scmp.eq.s32.totalorder %s14, 0
    %p41 = por %p39, %p40
    %s43 = sadd.s32 %s42, 1
    %p46 = scmp.eq.s32.totalorder %s8, 1
    %p47 = scmp.ne.s32.totalorder %s42, %s44
    %p48 = scmp.eq.s32.totalorder %s8, 0
    %p49 = por %p47, %p48
    %p50 = scmp.ne.s32.totalorder %s42, %s44
    %p51 = scmp.eq.s32.totalorder %s13, 1
    %p52 = por %p50, %p51
    %p53 = scmp.ne.s32.totalorder %s44, %s45
    %p54 = scmp.eq.s32.totalorder %s13, 0
    %p55 = por %p53, %p54
    %p56 = scmp.ne.s32.totalorder %s44, %s45
    %p57 = scmp.eq.s32.totalorder %s14, 1
    %p58 = por %p56, %p57
    %p60 = scmp.ne.s32.totalorder %s45, %s59
    %p61 = scmp.eq.s32.totalorder %s14, 0
    %p62 = por %p60, %p61
    %s63 = ssub.s32 %s8, %s15
    %p64 = scmp.eq.s32.totalorder %s63, 0
    %s66 = sadd.s32 %s65, 1
    %s67 = scalar_select %p64, %s65, %s66
    %p70 = pneg %p64
    %p71 = scmp.eq.s32.totalorder %s8, 1
    %p72 = por %p70, %p71
    %p73 = scmp.ne.s32.totalorder %s65, %s68
    %p74 = scmp.eq.s32.totalorder %s8, 0
    %p75 = por %p73, %p74
    %p76 = scmp.ne.s32.totalorder %s65, %s68
    %p77 = scmp.eq.s32.totalorder %s13, 1
    %p78 = por %p76, %p77
    %p79 = scmp.ne.s32.totalorder %s68, %s69
    %p80 = scmp.eq.s32.totalorder %s13, 0
    %p81 = por %p79, %p80
    %p82 = scmp.ne.s32.totalorder %s68, %s69
    %p83 = scmp.eq.s32.totalorder %s14, 1
    %p84 = por %p82, %p83
    %p86 = scmp.ne.s32.totalorder %s69, %s85
    %p87 = scmp.eq.s32.totalorder %s14, 0
    %p88 = por %p86, %p87
    %p89 = scmp.le.s32.totalorder 1, %s8
    %p90 = scmp.lt.s32.totalorder %s8, 3
    %p91 = pnand %p89, %p90
    %p92 = pneg %p91
    // Predicated region
    $region9: #{tpu_custom_call.1} parent=5 // pred_check
      _
    $region10: #{tpu_custom_call.1} parent=5 // pred_check_branch
      %94 = sbr.rel (%p91) target = $region12
    $region11: #{tpu_custom_call.1} parent=5 // pred_region
      %s95 = ssub.s32 %s8, 1
      // Predicated region
      $region13: #{tpu_custom_call.1} parent=11 // pred_check
        %p96 = pneg %p55
      $region14: #{tpu_custom_call.1} parent=11 // pred_check_branch
        %98 = sbr.rel (%p96) target = $region16
      $region15: #{tpu_custom_call.1} parent=11 // pred_region
        _
      $region16: #{tpu_custom_call.1} parent=11 // pred_fallthru
        _
    $region12: #{tpu_custom_call.1} parent=5 // pred_fallthru
      _
    %p99 = scmp.lt.s32.totalorder %s8, 2
    // Predicated region
    $region17: #{tpu_custom_call.1} parent=5 // pred_check
      %p100 = pneg %p99
    $region18: #{tpu_custom_call.1} parent=5 // pred_check_branch
      %102 = sbr.rel (%p100) target = $region20
    $region19: #{tpu_custom_call.1} parent=5 // pred_region
      // Predicated region
      $region21: #{tpu_custom_call.1} parent=19 // pred_check
        %p103 = pneg %p28
      $region22: #{tpu_custom_call.1} parent=19 // pred_check_branch
        %105 = sbr.rel (%p103) target = $region24
      $region23: #{tpu_custom_call.1} parent=19 // pred_region
        %s106 = smul.u32 32, %s8
        %p107 = scmp.lt.s32.totalorder %s106, 63
        %s108 = scalar_select %p107, %s106, 63
        %s109 = smul.addr %s108, 8
        %s110 = scalar_lea.vmem %s0, %s109
        %s111 = smul.u32 32, %s8
      $region24: #{tpu_custom_call.1} parent=19 // pred_fallthru
        _
    $region20: #{tpu_custom_call.1} parent=5 // pred_fallthru
      _
    %p112 = scmp.le.s32.totalorder 1, %s8
    %p113 = scmp.lt.s32.totalorder %s8, 3
    %p114 = pnand %p112, %p113
    %p115 = pneg %p114
    // Predicated region
    $region25: #{tpu_custom_call.1} parent=5 // pred_check
      _
    $region26: #{tpu_custom_call.1} parent=5 // pred_check_branch
      %117 = sbr.rel (%p114) target = $region28
    $region27: #{tpu_custom_call.1} parent=5 // pred_region
      %s118 = ssub.s32 %s8, 1
      %s119 = smul.u32 32, %s13
      %p120 = scmp.lt.s32.totalorder %s119, 63
      %s121 = scalar_select %p120, %s119, 63
      %s122 = smul.addr %s121, 8
      %s123 = scalar_lea.vmem %s0, %s122
      %p124 = pneg %p34
      %p125 = pneg %p31
      %p126 = pneg %p55
      %p127 = pneg %p52
      %p128 = pneg %p81
      %p129 = pneg %p78
      %s130 = smul.u32 32, %s13
      %p131 = scmp.lt.s32.totalorder %s130, 63
      %s132 = scalar_select %p131, %s130, 63
      %s133 = smul.addr %s132, 4
      %s134 = scalar_lea.vmem %s2, %s133
      %s135 = smul.u32 32, %s13
      %p136 = scmp.lt.s32.totalorder %s135, 63
      %s137 = scalar_select %p136, %s135, 63
      %s138 = smul.addr %s137, 8
      %s139 = scalar_lea.vmem %s0, %s138
      %s140 = smul.u32 32, %s13
      %s141 = smul.u32 32, %s13
      %p142 = scmp.lt.s32.totalorder %s141, 63
      %s143 = scalar_select %p142, %s141, 63
      %s144 = smul.addr %s143, 4
      %s145 = scalar_lea.vmem %s2, %s144
      %s146 = smul.u32 32, %s13
      %v147 = vld [vmem:[%s139] sm:$0xff]
      %v148 = vld [vmem:[%s139 + $0x8] sm:$0xff]
      %v149 = vld [vmem:[%s139 + $0x10] sm:$0xff]
      %v150 = vld [vmem:[%s139 + $0x18] sm:$0xff]
      %v151 = vld [vmem:[%s139 + $0x20] sm:$0xff]
      %v152 = vld [vmem:[%s139 + $0x28] sm:$0xff]
      %v153 = vld [vmem:[%s139 + $0x30] sm:$0xff]
      %v154 = vld [vmem:[%s139 + $0x38] sm:$0xff]
      %v155 = vld [vmem:[%s139 + $0x40] sm:$0xff]
      %v156 = vld [vmem:[%s139 + $0x48] sm:$0xff]
      %v157 = vld [vmem:[%s139 + $0x50] sm:$0xff]
      %v158 = vld [vmem:[%s139 + $0x58] sm:$0xff]
      %v159 = vld [vmem:[%s139 + $0x60] sm:$0xff]
      %v160 = vld [vmem:[%s139 + $0x68] sm:$0xff]
      %v161 = vld [vmem:[%s139 + $0x70] sm:$0xff]
      %v162 = vld [vmem:[%s139 + $0x78] sm:$0xff]
      %v163 = vld [vmem:[%s139 + $0x80] sm:$0xff]
      %v164 = vld [vmem:[%s139 + $0x88] sm:$0xff]
      %v165 = vld [vmem:[%s139 + $0x90] sm:$0xff]
      %v166 = vld [vmem:[%s139 + $0x98] sm:$0xff]
      %v167 = vld [vmem:[%s139 + $0xa0] sm:$0xff]
      %v168 = vld [vmem:[%s139 + $0xa8] sm:$0xff]
      %v169 = vld [vmem:[%s139 + $0xb0] sm:$0xff]
      %v170 = vld [vmem:[%s139 + $0xb8] sm:$0xff]
      %v171 = vld [vmem:[%s139 + $0xc0] sm:$0xff]
      %v172 = vld [vmem:[%s139 + $0xc8] sm:$0xff]
      %v173 = vld [vmem:[%s139 + $0xd0] sm:$0xff]
      %v174 = vld [vmem:[%s139 + $0xd8] sm:$0xff]
      %v175 = vld [vmem:[%s139 + $0xe0] sm:$0xff]
      %v176 = vld [vmem:[%s139 + $0xe8] sm:$0xff]
      %v177 = vld [vmem:[%s139 + $0xf0] sm:$0xff]
      %v178 = vld [vmem:[%s139 + $0xf8] sm:$0xff]
      %v179 = vld [vmem:[%s1] sm:$0xff]
      %v180 = vld [vmem:[%s1 + $0x8] sm:$0xff]
      %v181 = vld [vmem:[%s1 + $0x10] sm:$0xff]
      %v182 = vld [vmem:[%s1 + $0x18] sm:$0xff]
      %vm183 = vcmask 261120
      %v185 = vsel %vm183, %v147, 0
      %v188 = vsel %vm183, %v148, 0
      %v191 = vsel %vm183, %v149, 0
      %v194 = vsel %vm183, %v150, 0
      %v197 = vsel %vm183, %v151, 0
      %v200 = vsel %vm183, %v152, 0
      %v203 = vsel %vm183, %v153, 0
      %v206 = vsel %vm183, %v154, 0
      %v209 = vsel %vm183, %v155, 0
      %v212 = vsel %vm183, %v156, 0
      %v215 = vsel %vm183, %v157, 0
      %v218 = vsel %vm183, %v158, 0
      %v221 = vsel %vm183, %v159, 0
      %v224 = vsel %vm183, %v160, 0
      %v227 = vsel %vm183, %v161, 0
      %v230 = vsel %vm183, %v162, 0
      %v233 = vsel %vm183, %v163, 0
      %v236 = vsel %vm183, %v164, 0
      %v239 = vsel %vm183, %v165, 0
      %v242 = vsel %vm183, %v166, 0
      %v245 = vsel %vm183, %v167, 0
      %v248 = vsel %vm183, %v168, 0
      %v251 = vsel %vm183, %v169, 0
      %v254 = vsel %vm183, %v170, 0
      %v257 = vsel %vm183, %v171, 0
      %v260 = vsel %vm183, %v172, 0
      %v263 = vsel %vm183, %v173, 0
      %v266 = vsel %vm183, %v174, 0
      %v269 = vsel %vm183, %v175, 0
      %v272 = vsel %vm183, %v176, 0
      %v275 = vsel %vm183, %v177, 0
      %v278 = vsel %vm183, %v178, 0
      %280 = vmatprep.subr.mxu0 0.0
      %281 = vmatpush1.msra.mxu0 %v179
      %282 = vmatprep.subr.mxu0 0.0
      %283 = vmatpush1.msra.mxu0 %v180
      %284 = vmatprep.subr.mxu0 0.0
      %285 = vmatpush1.msra.mxu0 %v181
      %286 = vmatprep.subr.mxu0 0.0
      %287 = vmatpush1.msra.mxu0 %v182
      %288 = vmatprep.subr.mxu0 0.0
      %289 = vmatpush1.msra.mxu0 0.0
      %290 = vmatprep.subr.mxu0 0.0
      %291 = vmatpush1.msra.mxu0 0.0
      %292 = vmatprep.subr.mxu0 0.0
      %293 = vmatpush1.msra.mxu0 0.0
      %294 = vmatprep.subr.mxu0 0.0
      %295 = vmatpush1.msra.mxu0 0.0
      %296 = vmatprep.subr.mxu0 0.0
      %297 = vmatpush1.msra.mxu0 0.0
      %298 = vmatprep.subr.mxu0 0.0
      %299 = vmatpush1.msra.mxu0 0.0
      %300 = vmatprep.subr.mxu0 0.0
      %301 = vmatpush1.msra.mxu0 0.0
      %302 = vmatprep.subr.mxu0 0.0
      %303 = vmatpush1.msra.mxu0 0.0
      %304 = vmatprep.subr.mxu0 0.0
      %305 = vmatpush1.msra.mxu0 0.0
      %306 = vmatprep.subr.mxu0 0.0
      %307 = vmatpush1.msra.mxu0 0.0
      %308 = vmatprep.subr.mxu0 0.0
      %309 = vmatpush1.msra.mxu0 0.0
      %310 = vmatprep.subr.mxu0 0.0
      %311 = vmatpush1.msra.mxu0 0.0
      %312 = vmatprep.subr.mxu0 0.0
      %313 = vmatpush1.msra.mxu0 0.0
      %314 = vmatprep.subr.mxu0 0.0
      %315 = vmatpush1.msra.mxu0 0.0
      %316 = vmatprep.subr.mxu0 0.0
      %317 = vmatpush1.msra.mxu0 0.0
      %318 = vmatprep.subr.mxu0 0.0
      %319 = vmatpush1.msra.mxu0 0.0
      %320 = vmatprep.subr.mxu0 0.0
      %321 = vmatpush1.msra.mxu0 0.0
      %322 = vmatprep.subr.mxu0 0.0
      %323 = vmatpush1.msra.mxu0 0.0
      %324 = vmatprep.subr.mxu0 0.0
      %325 = vmatpush1.msra.mxu0 0.0
      %326 = vmatprep.subr.mxu0 0.0
      %327 = vmatpush1.msra.mxu0 0.0
      %328 = vmatprep.subr.mxu0 0.0
      %329 = vmatpush1.msra.mxu0 0.0
      %330 = vmatprep.subr.mxu0 0.0
      %331 = vmatpush1.msra.mxu0 0.0
      %332 = vmatprep.subr.mxu0 0.0
      %333 = vmatpush1.msra.mxu0 0.0
      %334 = vmatprep.subr.mxu0 0.0
      %335 = vmatpush1.msra.mxu0 0.0
      %336 = vmatprep.subr.mxu0 0.0
      %337 = vmatpush1.msra.mxu0 0.0
      %338 = vmatprep.subr.mxu0 0.0
      %339 = vmatpush1.msra.mxu0 0.0
      %340 = vmatprep.subr.mxu0 0.0
      %341 = vmatpush1.msra.mxu0 0.0
      %342 = vmatprep.subr.mxu0 0.0
      %343 = vmatpush1.msra.mxu0 0.0
      %344 = vmatprep.mubr.f32.mxu0 0.0
      %345 = vmatmul.mubr.f32.gmra.mrb[0].mxu0 %v185
      %v346 = vpop.f32.mrb[0].mxu0
      %v347 = vadd.f32 0.0, %v346
      %v348 = vpop.f32.mrb[0].mxu0
      %349 = vmatprep.mubr.f32.mxu0 0.0
      %350 = vmatmul.mubr.f32.gmra.mrb[0].mxu0 %v188
      %v351 = vpop.f32.mrb[0].mxu0
      %v352 = vadd.f32 0.0, %v351
      %v353 = vpop.f32.mrb[0].mxu0
      %354 = vmatprep.mubr.f32.mxu0 0.0
      %355 = vmatmul.mubr.f32.gmra.mrb[0].mxu0 %v191
      %v356 = vpop.f32.mrb[0].mxu0
      %v357 = vadd.f32 0.0, %v356
      %v358 = vpop.f32.mrb[0].mxu0
      %359 = vmatprep.mubr.f32.mxu0 0.0
      %360 = vmatmul.mubr.f32.gmra.mrb[0].mxu0 %v194
      %v361 = vpop.f32.mrb[0].mxu0
      %v362 = vadd.f32 0.0, %v361
      %v363 = vpop.f32.mrb[0].mxu0
      %364 = vmatprep.mubr.f32.mxu0 0.0
      %365 = vmatmul.mubr.f32.gmra.mrb[0].mxu0 %v197
      %v366 = vpop.f32.mrb[0].mxu0
      %v367 = vadd.f32 0.0, %v366
      %v368 = vpop.f32.mrb[0].mxu0
      %369 = vmatprep.mubr.f32.mxu0 0.0
      %370 = vmatmul.mubr.f32.gmra.mrb[0].mxu0 %v200
      %v371 = vpop.f32.mrb[0].mxu0
      %v372 = vadd.f32 0.0, %v371
      %v373 = vpop.f32.mrb[0].mxu0
      %374 = vmatprep.mubr.f32.mxu0 0.0
      %375 = vmatmul.mubr.f32.gmra.mrb[0].mxu0 %v203
      %v376 = vpop.f32.mrb[0].mxu0
      %v377 = vadd.f32 0.0, %v376
      %v378 = vpop.f32.mrb[0].mxu0
      %379 = vmatprep.mubr.f32.mxu0 0.0
      %380 = vmatmul.mubr.f32.gmra.mrb[0].mxu0 %v206
      %v381 = vpop.f32.mrb[0].mxu0
      %v382 = vadd.f32 0.0, %v381
      %v383 = vpop.f32.mrb[0].mxu0
      %384 = vmatprep.mubr.f32.mxu0 0.0
      %385 = vmatmul.mubr.f32.gmra.mrb[0].mxu0 %v209
      %v386 = vpop.f32.mrb[0].mxu0
      %v387 = vadd.f32 0.0, %v386
      %v388 = vpop.f32.mrb[0].mxu0
      %389 = vmatprep.mubr.f32.mxu0 0.0
      %390 = vmatmul.mubr.f32.gmra.mrb[0].mxu0 %v212
      %v391 = vpop.f32.mrb[0].mxu0
      %v392 = vadd.f32 0.0, %v391
      %v393 = vpop.f32.mrb[0].mxu0
      %394 = vmatprep.mubr.f32.mxu0 0.0
      %395 = vmatmul.mubr.f32.gmra.mrb[0].mxu0 %v215
      %v396 = vpop.f32.mrb[0].mxu0
      %v397 = vadd.f32 0.0, %v396
      %v398 = vpop.f32.mrb[0].mxu0
      %399 = vmatprep.mubr.f32.mxu0 0.0
      %400 = vmatmul.mubr.f32.gmra.mrb[0].mxu0 %v218
      %v401 = vpop.f32.mrb[0].mxu0
      %v402 = vadd.f32 0.0, %v401
      %v403 = vpop.f32.mrb[0].mxu0
      %404 = vmatprep.mubr.f32.mxu0 0.0
      %405 = vmatmul.mubr.f32.gmra.mrb[0].mxu0 %v221
      %v406 = vpop.f32.mrb[0].mxu0
      %v407 = vadd.f32 0.0, %v406
      %v408 = vpop.f32.mrb[0].mxu0
      %409 = vmatprep.mubr.f32.mxu0 0.0
      %410 = vmatmul.mubr.f32.gmra.mrb[0].mxu0 %v224
      %v411 = vpop.f32.mrb[0].mxu0
      %v412 = vadd.f32 0.0, %v411
      %v413 = vpop.f32.mrb[0].mxu0
      %414 = vmatprep.mubr.f32.mxu0 0.0
      %415 = vmatmul.mubr.f32.gmra.mrb[0].mxu0 %v227
      %v416 = vpop.f32.mrb[0].mxu0
      %v417 = vadd.f32 0.0, %v416
      %v418 = vpop.f32.mrb[0].mxu0
      %419 = vmatprep.mubr.f32.mxu0 0.0
      %420 = vmatmul.mubr.f32.gmra.mrb[0].mxu0 %v230
      %v421 = vpop.f32.mrb[0].mxu0
      %v422 = vadd.f32 0.0, %v421
      %v423 = vpop.f32.mrb[0].mxu0
      %424 = vmatprep.mubr.f32.mxu0 0.0
      %425 = vmatmul.mubr.f32.gmra.mrb[0].mxu0 %v233
      %v426 = vpop.f32.mrb[0].mxu0
      %v427 = vadd.f32 0.0, %v426
      %v428 = vpop.f32.mrb[0].mxu0
      %429 = vmatprep.mubr.f32.mxu0 0.0
      %430 = vmatmul.mubr.f32.gmra.mrb[0].mxu0 %v236
      %v431 = vpop.f32.mrb[0].mxu0
      %v432 = vadd.f32 0.0, %v431
      %v433 = vpop.f32.mrb[0].mxu0
      %434 = vmatprep.mubr.f32.mxu0 0.0
      %435 = vmatmul.mubr.f32.gmra.mrb[0].mxu0 %v239
      %v436 = vpop.f32.mrb[0].mxu0
      %v437 = vadd.f32 0.0, %v436
      %v438 = vpop.f32.mrb[0].mxu0
      %439 = vmatprep.mubr.f32.mxu0 0.0
      %440 = vmatmul.mubr.f32.gmra.mrb[0].mxu0 %v242
      %v441 = vpop.f32.mrb[0].mxu0
      %v442 = vadd.f32 0.0, %v441
      %v443 = vpop.f32.mrb[0].mxu0
      %444 = vmatprep.mubr.f32.mxu0 0.0
      %445 = vmatmul.mubr.f32.gmra.mrb[0].mxu0 %v245
      %v446 = vpop.f32.mrb[0].mxu0
      %v447 = vadd.f32 0.0, %v446
      %v448 = vpop.f32.mrb[0].mxu0
      %449 = vmatprep.mubr.f32.mxu0 0.0
      %450 = vmatmul.mubr.f32.gmra.mrb[0].mxu0 %v248
      %v451 = vpop.f32.mrb[0].mxu0
      %v452 = vadd.f32 0.0, %v451
      %v453 = vpop.f32.mrb[0].mxu0
      %454 = vmatprep.mubr.f32.mxu0 0.0
      %455 = vmatmul.mubr.f32.gmra.mrb[0].mxu0 %v251
      %v456 = vpop.f32.mrb[0].mxu0
      %v457 = vadd.f32 0.0, %v456
      %v458 = vpop.f32.mrb[0].mxu0
      %459 = vmatprep.mubr.f32.mxu0 0.0
      %460 = vmatmul.mubr.f32.gmra.mrb[0].mxu0 %v254
      %v461 = vpop.f32.mrb[0].mxu0
      %v462 = vadd.f32 0.0, %v461
      %v463 = vpop.f32.mrb[0].mxu0
      %464 = vmatprep.mubr.f32.mxu0 0.0
      %465 = vmatmul.mubr.f32.gmra.mrb[0].mxu0 %v257
      %v466 = vpop.f32.mrb[0].mxu0
      %v467 = vadd.f32 0.0, %v466
      %v468 = vpop.f32.mrb[0].mxu0
      %469 = vmatprep.mubr.f32.mxu0 0.0
      %470 = vmatmul.mubr.f32.gmra.mrb[0].mxu0 %v260
      %v471 = vpop.f32.mrb[0].mxu0
      %v472 = vadd.f32 0.0, %v471
      %v473 = vpop.f32.mrb[0].mxu0
      %474 = vmatprep.mubr.f32.mxu0 0.0
      %475 = vmatmul.mubr.f32.gmra.mrb[0].mxu0 %v263
      %v476 = vpop.f32.mrb[0].mxu0
      %v477 = vadd.f32 0.0, %v476
      %v478 = vpop.f32.mrb[0].mxu0
      %479 = vmatprep.mubr.f32.mxu0 0.0
      %480 = vmatmul.mubr.f32.gmra.mrb[0].mxu0 %v266
      %v481 = vpop.f32.mrb[0].mxu0
      %v482 = vadd.f32 0.0, %v481
      %v483 = vpop.f32.mrb[0].mxu0
      %484 = vmatprep.mubr.f32.mxu0 0.0
      %485 = vmatmul.mubr.f32.gmra.mrb[0].mxu0 %v269
      %v486 = vpop.f32.mrb[0].mxu0
      %v487 = vadd.f32 0.0, %v486
      %v488 = vpop.f32.mrb[0].mxu0
      %489 = vmatprep.mubr.f32.mxu0 0.0
      %490 = vmatmul.mubr.f32.gmra.mrb[0].mxu0 %v272
      %v491 = vpop.f32.mrb[0].mxu0
      %v492 = vadd.f32 0.0, %v491
      %v493 = vpop.f32.mrb[0].mxu0
      %494 = vmatprep.mubr.f32.mxu0 0.0
      %495 = vmatmul.mubr.f32.gmra.mrb[0].mxu0 %v275
      %v496 = vpop.f32.mrb[0].mxu0
      %v497 = vadd.f32 0.0, %v496
      %v498 = vpop.f32.mrb[0].mxu0
      %499 = vmatprep.mubr.f32.mxu0 0.0
      %500 = vmatmul.mubr.f32.gmra.mrb[0].mxu0 %v278
      %v501 = vpop.f32.mrb[0].mxu0
      %v502 = vadd.f32 0.0, %v501
      %v503 = vpop.f32.mrb[0].mxu0
      %504 = vdwg.mxu0
      %v505 = vpack.c.bf16 %v352, %v347
      %v506 = vpack.c.bf16 %v362, %v357
      %v507 = vpack.c.bf16 %v372, %v367
      %v508 = vpack.c.bf16 %v382, %v377
      %v509 = vpack.c.bf16 %v392, %v387
      %v510 = vpack.c.bf16 %v402, %v397
      %v511 = vpack.c.bf16 %v412, %v407
      %v512 = vpack.c.bf16 %v422, %v417
      %v513 = vpack.c.bf16 %v432, %v427
      %v514 = vpack.c.bf16 %v442, %v437
      %v515 = vpack.c.bf16 %v452, %v447
      %v516 = vpack.c.bf16 %v462, %v457
      %v517 = vpack.c.bf16 %v472, %v467
      %v518 = vpack.c.bf16 %v482, %v477
      %v519 = vpack.c.bf16 %v492, %v487
      %v520 = vpack.c.bf16 %v502, %v497
      %v537 = vunpack.c.l.b16 %v505
      %v538 = vunpack.c.h.b16 %v505
      %v539 = vunpack.c.l.b16 %v506
      %v540 = vunpack.c.h.b16 %v506
      %v541 = vunpack.c.l.b16 %v507
      %v542 = vunpack.c.h.b16 %v507
      %v543 = vunpack.c.l.b16 %v508
      %v544 = vunpack.c.h.b16 %v508
      %v545 = vunpack.c.l.b16 %v509
      %v546 = vunpack.c.h.b16 %v509
      %v547 = vunpack.c.l.b16 %v510
      %v548 = vunpack.c.h.b16 %v510
      %v549 = vunpack.c.l.b16 %v511
      %v550 = vunpack.c.h.b16 %v511
      %v551 = vunpack.c.l.b16 %v512
      %v552 = vunpack.c.h.b16 %v512
      %v553 = vunpack.c.l.b16 %v513
      %v554 = vunpack.c.h.b16 %v513
      %v555 = vunpack.c.l.b16 %v514
      %v556 = vunpack.c.h.b16 %v514
      %v557 = vunpack.c.l.b16 %v515
      %v558 = vunpack.c.h.b16 %v515
      %v559 = vunpack.c.l.b16 %v516
      %v560 = vunpack.c.h.b16 %v516
      %v561 = vunpack.c.l.b16 %v517
      %v562 = vunpack.c.h.b16 %v517
      %v563 = vunpack.c.l.b16 %v518
      %v564 = vunpack.c.h.b16 %v518
      %v565 = vunpack.c.l.b16 %v519
      %v566 = vunpack.c.h.b16 %v519
      %v567 = vunpack.c.l.b16 %v520
      %v568 = vunpack.c.h.b16 %v520
      %v569 = vpack.c.b16 %v537, %v537
      %v570 = vpack.c.b16 %v538, %v538
      %v571 = vpack.c.b16 %v539, %v539
      %v572 = vpack.c.b16 %v540, %v540
      %v573 = vpack.c.b16 %v541, %v541
      %v574 = vpack.c.b16 %v542, %v542
      %v575 = vpack.c.b16 %v543, %v543
      %v576 = vpack.c.b16 %v544, %v544
      %v577 = vpack.c.b16 %v545, %v545
      %v578 = vpack.c.b16 %v546, %v546
      %v579 = vpack.c.b16 %v547, %v547
      %v580 = vpack.c.b16 %v548, %v548
      %v581 = vpack.c.b16 %v549, %v549
      %v582 = vpack.c.b16 %v550, %v550
      %v583 = vpack.c.b16 %v551, %v551
      %v584 = vpack.c.b16 %v552, %v552
      %v585 = vpack.c.b16 %v553, %v553
      %v586 = vpack.c.b16 %v554, %v554
      %v587 = vpack.c.b16 %v555, %v555
      %v588 = vpack.c.b16 %v556, %v556
      %v589 = vpack.c.b16 %v557, %v557
      %v590 = vpack.c.b16 %v558, %v558
      %v591 = vpack.c.b16 %v559, %v559
      %v592 = vpack.c.b16 %v560, %v560
      %v593 = vpack.c.b16 %v561, %v561
      %v594 = vpack.c.b16 %v562, %v562
      %v595 = vpack.c.b16 %v563, %v563
      %v596 = vpack.c.b16 %v564, %v564
      %v597 = vpack.c.b16 %v565, %v565
      %v598 = vpack.c.b16 %v566, %v566
      %v599 = vpack.c.b16 %v567, %v567
      %v600 = vpack.c.b16 %v568, %v568
      %vm633 = vcmask 257024
      %634 = vst.msk [vmem:[%s145] sm:$0xf] %vm633, %v569
      %635 = vst.msk [vmem:[%s145 + $0x4] sm:$0xf] %vm633, %v570
      %636 = vst.msk [vmem:[%s145 + $0x8] sm:$0xf] %vm633, %v571
      %637 = vst.msk [vmem:[%s145 + $0xc] sm:$0xf] %vm633, %v572
      %638 = vst.msk [vmem:[%s145 + $0x10] sm:$0xf] %vm633, %v573
      %639 = vst.msk [vmem:[%s145 + $0x14] sm:$0xf] %vm633, %v574
      %640 = vst.msk [vmem:[%s145 + $0x18] sm:$0xf] %vm633, %v575
      %641 = vst.msk [vmem:[%s145 + $0x1c] sm:$0xf] %vm633, %v576
      %642 = vst.msk [vmem:[%s145 + $0x20] sm:$0xf] %vm633, %v577
      %643 = vst.msk [vmem:[%s145 + $0x24] sm:$0xf] %vm633, %v578
      %644 = vst.msk [vmem:[%s145 + $0x28] sm:$0xf] %vm633, %v579
      %645 = vst.msk [vmem:[%s145 + $0x2c] sm:$0xf] %vm633, %v580
      %646 = vst.msk [vmem:[%s145 + $0x30] sm:$0xf] %vm633, %v581
      %647 = vst.msk [vmem:[%s145 + $0x34] sm:$0xf] %vm633, %v582
      %648 = vst.msk [vmem:[%s145 + $0x38] sm:$0xf] %vm633, %v583
      %649 = vst.msk [vmem:[%s145 + $0x3c] sm:$0xf] %vm633, %v584
      %650 = vst.msk [vmem:[%s145 + $0x40] sm:$0xf] %vm633, %v585
      %651 = vst.msk [vmem:[%s145 + $0x44] sm:$0xf] %vm633, %v586
      %652 = vst.msk [vmem:[%s145 + $0x48] sm:$0xf] %vm633, %v587
      %653 = vst.msk [vmem:[%s145 + $0x4c] sm:$0xf] %vm633, %v588
      %654 = vst.msk [vmem:[%s145 + $0x50] sm:$0xf] %vm633, %v589
      %655 = vst.msk [vmem:[%s145 + $0x54] sm:$0xf] %vm633, %v590
      %656 = vst.msk [vmem:[%s145 + $0x58] sm:$0xf] %vm633, %v591
      %657 = vst.msk [vmem:[%s145 + $0x5c] sm:$0xf] %vm633, %v592
      %658 = vst.msk [vmem:[%s145 + $0x60] sm:$0xf] %vm633, %v593
      %659 = vst.msk [vmem:[%s145 + $0x64] sm:$0xf] %vm633, %v594
      %660 = vst.msk [vmem:[%s145 + $0x68] sm:$0xf] %vm633, %v595
      %661 = vst.msk [vmem:[%s145 + $0x6c] sm:$0xf] %vm633, %v596
      %662 = vst.msk [vmem:[%s145 + $0x70] sm:$0xf] %vm633, %v597
      %663 = vst.msk [vmem:[%s145 + $0x74] sm:$0xf] %vm633, %v598
      %664 = vst.msk [vmem:[%s145 + $0x78] sm:$0xf] %vm633, %v599
      %665 = vst.msk [vmem:[%s145 + $0x7c] sm:$0xf] %vm633, %v600
      %s666 = smul.u32 32, %s13
      %p667 = scmp.lt.s32.totalorder %s666, 63
      %s668 = scalar_select %p667, %s666, 63
      %s669 = smul.addr %s668, 4
      %s670 = scalar_lea.vmem %s2, %s669
      // Predicated region
      $region29: #{tpu_custom_call.1} parent=27 // pred_check
        %p671 = pneg %p78
      $region30: #{tpu_custom_call.1} parent=27 // pred_check_branch
        %673 = sbr.rel (%p671) target = $region32
      $region31: #{tpu_custom_call.1} parent=27 // pred_region
        %s674 = smul.u32 32, %s13
      $region32: #{tpu_custom_call.1} parent=27 // pred_fallthru
        _
    $region28: #{tpu_custom_call.1} parent=5 // pred_fallthru
      _
    %p675 = scmp.le.s32.totalorder 2, %s8
    // Predicated region
    $region33: #{tpu_custom_call.1} parent=5 // pred_check
      %p676 = pneg %p675
    $region34: #{tpu_custom_call.1} parent=5 // pred_check_branch
      %678 = sbr.rel (%p676) target = $region36
    $region35: #{tpu_custom_call.1} parent=5 // pred_region
      %s679 = ssub.s32 %s8, 2
      // Predicated region
      $region37: #{tpu_custom_call.1} parent=35 // pred_check
        %p680 = pneg %p84
      $region38: #{tpu_custom_call.1} parent=35 // pred_check_branch
        %682 = sbr.rel (%p680) target = $region40
      $region39: #{tpu_custom_call.1} parent=35 // pred_region
        %s683 = smul.u32 32, %s14
        %p684 = scmp.lt.s32.totalorder %s683, 63
        %s685 = scalar_select %p684, %s683, 63
        %s686 = smul.addr %s685, 4
        %s687 = scalar_lea.vmem %s2, %s686
      $region40: #{tpu_custom_call.1} parent=35 // pred_fallthru
        _
    $region36: #{tpu_custom_call.1} parent=5 // pred_fallthru
      _
  $region6: #{tpu_custom_call.1} parent=0 // loop_footer
    %s12 = sadd.s32 1, %s8
  $region7: #{tpu_custom_call.1} parent=0 // loop_footer_branch
    %7 = sbr.rel target = $region3
  $region8: #{tpu_custom_call.1} parent=0 // loop_exit
    _

</llo_original>
